<compile_context>
chip_gen: v7x
topology: tpu7x:2x2x1
jax: 0.10.0
libtpu: 0.0.40
codegen_flags: <defaults>
</compile_context>

<pallas_src>
import functools

import jax
import jax.numpy as jnp
from jax.experimental import pallas as pl
from jax.experimental.pallas import tpu as pltpu


def _onehot_kernel(labels_ref, out_ref, *, probabilities):
    """labels_ref: (TM, L) int32 in VMEM; out_ref: (TM, TC) block in VMEM."""
    tc = out_ref.shape[-1]
    j = pl.program_id(1)                       # class-axis tile index
    # (1, TC) iota broadcast against (TM, 1) labels; offset by this block's
    # class-dim origin.  Keeping the iota one row avoids TM*TC/1024 vregs of
    # pure VPU filler per tile.
    class_ids = jax.lax.broadcasted_iota(jnp.int32, (1, tc), 1) + j * tc
    # Fold the first probability into the initial select (no zeros pass).
    lab0 = labels_ref[:, 0:1]                  # (TM, 1)
    out = jnp.where(class_ids == lab0,
                    jnp.float32(probabilities[0]), jnp.float32(0.0))
    # Ordered assignment: later list indices overwrite earlier ones (matches
    # the sequential `list_prob[label] = prob` writes in the PyTorch loop).
    for l in range(1, len(probabilities)):
        lab = labels_ref[:, l:l + 1]
        out = jnp.where(class_ids == lab, jnp.float32(probabilities[l]), out)
    out_ref[...] = out.astype(out_ref.dtype)


def pkg_label_onehot(PKG_label, *, batch_size, T, num_lists, probabilities,
                     class_dim_graph,
                     target_tile_bytes=8 * 1024 * 1024,
                     max_class_tile=65536,
                     out_dtype=jnp.float32):
    probs = [float(p) for p in probabilities]
    if probs == [1.0]:
        # PKG_label: (B, T); single assignment of 1.0 per row.
        labels_rows = PKG_label.reshape(batch_size * T, 1).astype(jnp.int32)
        probs_eff = [1.0]
    else:
        # PKG_label: (B, num_lists, T)
        assert len(probs) >= num_lists, (
            "probabilities must have at least num_lists entries")
        probs_eff = probs[:num_lists]
        # (B, L, T) -> (B, T, L) -> (B*T, L); tiny input, transpose is cheap.
        labels_rows = (
            jnp.transpose(PKG_label, (0, 2, 1))
            .reshape(batch_size * T, num_lists)
            .astype(jnp.int32))

    L = labels_rows.shape[1]
    BT = batch_size * T
    C = class_dim_graph

    # ---- class-axis tile ----------------------------------------------------
    # Full-C block when it fits (legal "full array dim" block even when C is
    # not a multiple of 128; only the last partial vreg store is lane-masked).
    # For huge C, tile with a 128-multiple so VMEM stays bounded on v7x.
    if C <= max_class_tile:
        TC = C
    else:
        TC = max_class_tile                       # multiple of 128
    C_lanes = pl.cdiv(TC, 128) * 128              # VMEM lane footprint / row
    L_lanes = pl.cdiv(L, 128) * 128               # labels rows are lane-padded

    # ---- row tile -----------------------------------------------------------
    # Big enough to amortize ~0.35us/step overhead against HBM writeback
    # (~8-16 MiB tiles for v7x's ~3.2 TB/s); small enough that double-buffered
    # output + lane-padded labels buffers stay under ~36 MiB of VMEM.
    rows_for_target = max(8, (target_tile_bytes // (C_lanes * 4)) // 8 * 8)
    bytes_per_row = (C_lanes + L_lanes) * 4       # out row + labels row (f32/i32)
    rows_vmem_cap = max(8, ((36 << 20) // (2 * bytes_per_row)) // 8 * 8)
    TM = min(rows_for_target, rows_vmem_cap)
    if TM >= BT:
        TM = BT                                   # single full-dim row block

    grid = (pl.cdiv(BT, TM), pl.cdiv(C, TC))

    vmem_needed = 2 * TM * bytes_per_row + (2 << 20)
    vmem_limit = min(max(vmem_needed, 32 << 20), 48 << 20)

    kernel = functools.partial(_onehot_kernel, probabilities=probs_eff)
    out_itemsize = jnp.dtype(out_dtype).itemsize

    out = pl.pallas_call(
        kernel,
        out_shape=jax.ShapeDtypeStruct((BT, C), out_dtype),
        grid=grid,
        in_specs=[
            # Same labels block for every class tile j -> fetched once per i.
            pl.BlockSpec((TM, L), lambda i, j: (i, 0)),
        ],
        out_specs=pl.BlockSpec((TM, TC), lambda i, j: (i, j)),
        compiler_params=pltpu.CompilerParams(
            dimension_semantics=("parallel", "parallel"),
            vmem_limit_bytes=vmem_limit),
        cost_estimate=pl.CostEstimate(
            flops=len(probs_eff) * BT * C,
            transcendentals=0,
            bytes_accessed=BT * C * out_itemsize + BT * L * 4,
        ),
    )(labels_rows)

    # Exact-shape output: no padding strip, reshape is free (metadata only).
    return out.reshape(batch_size, T, class_dim_graph)


def _reference(PKG_label, *, batch_size, T, num_lists, probabilities,
               class_dim_graph):
    """Pure-numpy reference mirroring the PyTorch loops."""
    import numpy as np

    labels = jax.device_get(PKG_label)
    out = np.zeros((batch_size * T, class_dim_graph), dtype=np.float32)
    single = [float(p) for p in probabilities] == [1.0]
    for b in range(batch_size):
        for t in range(T):
            list_prob = np.zeros(class_dim_graph, dtype=np.float32)
            for l in range(num_lists):
                if single:
                    list_prob[labels[b][t]] = probabilities[l]
                else:
                    list_prob[labels[b][l][t]] = probabilities[l]
            out[b * T + t, :] = list_prob
    return out.reshape(batch_size, T, class_dim_graph)


if __name__ == "__main__":
    import numpy as np

    key = jax.random.PRNGKey(0)
    k1, k2, k3 = jax.random.split(key, 3)

    # ---- case 1: multi-list probabilities, C a multiple of 128 ----
    batch_size, T, num_lists = 2, 8, 3
    class_dim_graph = 128
    probabilities = [0.5, 0.3, 0.2]

    PKG_label = jax.random.randint(
        k1, (batch_size, num_lists, T), 0, class_dim_graph, dtype=jnp.int32)

    onehot = pkg_label_onehot(
        PKG_label, batch_size=batch_size, T=T, num_lists=num_lists,
        probabilities=probabilities, class_dim_graph=class_dim_graph)
    onehot = jax.block_until_ready(onehot)

    ref = _reference(
        PKG_label, batch_size=batch_size, T=T, num_lists=num_lists,
        probabilities=probabilities, class_dim_graph=class_dim_graph)
    np.testing.assert_allclose(np.asarray(onehot), ref, rtol=0, atol=0)
    assert onehot.shape == (batch_size, T, class_dim_graph)
    assert onehot.dtype == jnp.float32

    # ---- case 2: probabilities == [1] path, C NOT a multiple of 128 ----
    class_dim_graph2 = 100
    probabilities2 = [1]
    PKG_label2 = jax.random.randint(
        k2, (batch_size, T), 0, class_dim_graph2, dtype=jnp.int32)

    onehot2 = pkg_label_onehot(
        PKG_label2, batch_size=batch_size, T=T, num_lists=1,
        probabilities=probabilities2, class_dim_graph=class_dim_graph2)
    onehot2 = jax.block_until_ready(onehot2)

    ref2 = _reference(
        PKG_label2, batch_size=batch_size, T=T, num_lists=1,
        probabilities=probabilities2, class_dim_graph=class_dim_graph2)
    np.testing.assert_allclose(np.asarray(onehot2), ref2, rtol=0, atol=0)
    assert onehot2.shape == (batch_size, T, class_dim_graph2)

    # ---- case 3: odd B*T (not a multiple of 8) and odd C (not mult of 128) --
    batch_size3, T3, num_lists3 = 3, 5, 3
    class_dim_graph3 = 257
    probabilities3 = [0.6, 0.3, 0.1]
    PKG_label3 = jax.random.randint(
        k3, (batch_size3, num_lists3, T3), 0, class_dim_graph3,
        dtype=jnp.int32)

    onehot3 = pkg_label_onehot(
        PKG_label3, batch_size=batch_size3, T=T3, num_lists=num_lists3,
        probabilities=probabilities3, class_dim_graph=class_dim_graph3)
    onehot3 = jax.block_until_ready(onehot3)

    ref3 = _reference(
        PKG_label3, batch_size=batch_size3, T=T3, num_lists=num_lists3,
        probabilities=probabilities3, class_dim_graph=class_dim_graph3)
    np.testing.assert_allclose(np.asarray(onehot3), ref3, rtol=0, atol=0)
    assert onehot3.shape == (batch_size3, T3, class_dim_graph3)

    print("KERNEL_OK")
</pallas_src>

<mosaic_0001>
module attributes {stable_mosaic.version = 11 : i64} {
  func.func @_onehot_kernel(%arg0: i32, %arg1: i32, %arg2: memref<16x3xi32, #tpu.memory_space<vmem>>, %arg3: memref<16x128xf32, #tpu.memory_space<vmem>>) attributes {dimension_semantics = [#tpu.dimension_semantics<parallel>, #tpu.dimension_semantics<parallel>], iteration_bounds = array<i64: 1, 1>, scalar_prefetch = 0 : i64, scratch_operands = 0 : i64, tpu.core_type = #tpu.core_type<tc>, window_params = [{transform_indices = @transform_0, window_bounds = array<i64: 16, 3>}, {transform_indices = @transform_1, window_bounds = array<i64: 16, 128>}]} {
    %0 = tpu.iota {dimensions = array<i32: 1>} : vector<1x128xi32>
    %c128_i32 = arith.constant 128 : i32
    %1 = arith.muli %arg1, %c128_i32 : i32
    %2 = vector.broadcast %1 : i32 to vector<1x128xi32>
    %3 = arith.addi %0, %2 : vector<1x128xi32>
    %c0 = arith.constant 0 : index
    %c0_0 = arith.constant 0 : index
    %4 = vector.load %arg2[%c0, %c0_0] : memref<16x3xi32, #tpu.memory_space<vmem>>, vector<16x1xi32>
    %5 = vector.broadcast %3 : vector<1x128xi32> to vector<16x128xi32>
    %6 = vector.broadcast %4 : vector<16x1xi32> to vector<16x128xi32>
    %7 = arith.cmpi eq, %5, %6 : vector<16x128xi32>
    %cst = arith.constant 5.000000e-01 : f32
    %cst_1 = arith.constant 0.000000e+00 : f32
    %8 = vector.broadcast %cst : f32 to vector<16x128xf32>
    %9 = vector.broadcast %cst_1 : f32 to vector<16x128xf32>
    %10 = arith.select %7, %8, %9 : vector<16x128xi1>, vector<16x128xf32>
    %c0_2 = arith.constant 0 : index
    %c1 = arith.constant 1 : index
    %11 = vector.load %arg2[%c0_2, %c1] : memref<16x3xi32, #tpu.memory_space<vmem>>, vector<16x1xi32>
    %12 = vector.broadcast %3 : vector<1x128xi32> to vector<16x128xi32>
    %13 = vector.broadcast %11 : vector<16x1xi32> to vector<16x128xi32>
    %14 = arith.cmpi eq, %12, %13 : vector<16x128xi32>
    %cst_3 = arith.constant 3.000000e-01 : f32
    %15 = vector.broadcast %cst_3 : f32 to vector<16x128xf32>
    %16 = arith.select %14, %15, %10 : vector<16x128xi1>, vector<16x128xf32>
    %c0_4 = arith.constant 0 : index
    %c2 = arith.constant 2 : index
    %17 = vector.load %arg2[%c0_4, %c2] : memref<16x3xi32, #tpu.memory_space<vmem>>, vector<16x1xi32>
    %18 = vector.broadcast %3 : vector<1x128xi32> to vector<16x128xi32>
    %19 = vector.broadcast %17 : vector<16x1xi32> to vector<16x128xi32>
    %20 = arith.cmpi eq, %18, %19 : vector<16x128xi32>
    %cst_5 = arith.constant 2.000000e-01 : f32
    %21 = vector.broadcast %cst_5 : f32 to vector<16x128xf32>
    %22 = arith.select %20, %21, %16 : vector<16x128xi1>, vector<16x128xf32>
    %c0_6 = arith.constant 0 : index
    %c0_7 = arith.constant 0 : index
    %23 = vector.load %arg3[%c0_6, %c0_7] : memref<16x128xf32, #tpu.memory_space<vmem>>, vector<16x128xf32>
    tpu.vector_store %arg3[%c0_6, %c0_7], %22 {strides = array<i32>} : memref<16x128xf32, #tpu.memory_space<vmem>>, vector<16x128xf32>,
    return
  }
  func.func @transform_0(%arg0: i32, %arg1: i32) -> (i32, i32) {
    %c0_i32 = arith.constant 0 : i32
    %c0_i32_0 = arith.constant 0 : i32
    return %arg0, %c0_i32 : i32, i32
  }
  func.func @transform_1(%arg0: i32, %arg1: i32) -> (i32, i32) {
    %c0_i32 = arith.constant 0 : i32
    return %arg0, %arg1 : i32, i32
  }
}

</mosaic_0001>

<llo_original>
// kernel: tpu_custom_call.1
$region0: #{tpu_custom_call.1}
  #allocation0 [shape = 'u32[]', space=smem, size = 0x4, offset = 0x4, fixed_abs, tag = 'smem constant byte address 0x4 - core index']
  #allocation1 [shape = 'u32[144,128]{1,0:T(1,128)}', space=vmem, size = 0x12000, scoped, tag = 'internal scratch']
  %s0 = inlined_call_operand.vmem [shape: s32[16,3], index: 0, kind: input, shape index: {}]
  %s1 = inlined_call_operand.hbm [shape: f32[16,128], index: 1, kind: output, shape index: {}]
  %s2 = sld [smem:[#allocation0]]
  $region14: #{tpu_custom_call.1} parent=0
    _
  %s4 = ssub.s32 1, %s2
  %s5 = scalar_select 0, %s4, %s2
  $region1: #{tpu_custom_call.1} parent=0
    #allocation2 [shape = 'u8[8192]{0}', space=vmem, size = 0x2000, scoped, tag = 'output window, operand 0, single buffered']
    #allocation3 [shape = 's32[1]{0}', space=sflag, size = 0x4, scoped, tag = 'scoped memory for tpu_custom_call.1']
    %6 = vsyncpa [#allocation3], 0
    // Predicated region
    $region2: #{tpu_custom_call.1} parent=1 // pred_check
      _
    $region3: #{tpu_custom_call.1} parent=1 // pred_check_branch
      %8 = sbr.rel (0) target = $region5
    $region4: #{tpu_custom_call.1} parent=1 // pred_region
      _
    $region5: #{tpu_custom_call.1} parent=1 // pred_fallthru
      _
    %v9 = vlaneseq
    %v10 = vand.u32 %v9, 127
    %s11 = smul.u32 0, 128
    %v12 = vstv %s11
    %v13 = vadd.s32 %v10, %v12
    %v14 = vld [vmem:[%s0] sm:$0xff]
    %v15 = vld [vmem:[%s0 + $0x8] sm:$0xff]
    %16 = vset.pattern.permute.xlu0 0
    %17 = vperm.xlu0 %16, %v14
    %v18 = vpop.permute.xlu0 %17
    %19 = vset.pattern.permute.xlu0 0
    %20 = vperm.xlu0 %19, %v15
    %v21 = vpop.permute.xlu0 %20
    %vm22 = vcmp.eq.s32.totalorder %v13, %v18
    %vm23 = vcmp.eq.s32.totalorder %v13, %v21
    %v24 = vsel %vm22, 0.5, 0.0
    %v25 = vsel %vm23, 0.5, 0.0
    %26 = vset.pattern.permute.xlu0 1
    %27 = vperm.xlu0 %26, %v14
    %v28 = vpop.permute.xlu0 %27
    %29 = vset.pattern.permute.xlu0 1
    %30 = vperm.xlu0 %29, %v15
    %v31 = vpop.permute.xlu0 %30
    %vm32 = vcmp.eq.s32.totalorder %v13, %v28
    %vm33 = vcmp.eq.s32.totalorder %v13, %v31
    %v34 = vsel %vm32, 0.3, %v24
    %v35 = vsel %vm33, 0.3, %v25
    %36 = vset.pattern.permute.xlu0 2
    %37 = vperm.xlu0 %36, %v14
    %v38 = vpop.permute.xlu0 %37
    %39 = vset.pattern.permute.xlu0 2
    %40 = vperm.xlu0 %39, %v15
    %v41 = vpop.permute.xlu0 %40
    %vm42 = vcmp.eq.s32.totalorder %v13, %v38
    %vm43 = vcmp.eq.s32.totalorder %v13, %v41
    %v44 = vsel %vm42, 0.2, %v34
    %v45 = vsel %vm43, 0.2, %v35
    %46 = vst [vmem:[#allocation2] sm:$0xff] %v44
    %47 = vst [vmem:[#allocation2 + $0x8] sm:$0xff] %v45
    // Predicated region
    $region6: #{tpu_custom_call.1} parent=1 // pred_check
      _
    $region7: #{tpu_custom_call.1} parent=1 // pred_check_branch
      %49 = sbr.rel (0) target = $region9
    $region8: #{tpu_custom_call.1} parent=1 // pred_region
      %s51 = ssub.s32 256, 256
      %52 = vsyncadd [#allocation3], %s51
      %s53 = sshll.u32 [#allocation2], 4
      %s54 = int_to_ptr.vmem [resolvable:$true] %s53
      %59 = dma.vmem_to_hbm [thread:$0]  %s54, 256, %s1, [#allocation3], 128, 128, 8
    $region9: #{tpu_custom_call.1} parent=1 // pred_fallthru
      _
    // Predicated region
    $region10: #{tpu_custom_call.1} parent=1 // pred_check
      _
    $region11: #{tpu_custom_call.1} parent=1 // pred_check_branch
      %61 = sbr.rel (0) target = $region13
    $region12: #{tpu_custom_call.1} parent=1 // pred_region
      %62 = dma.done [#allocation3], 256
    $region13: #{tpu_custom_call.1} parent=1 // pred_fallthru
      _
    %63 = vsyncpa [#allocation3], 1

</llo_original>
